<compile_context>
chip_gen: v6e
topology: v6e:2x2x1
jax: 0.10.0
libtpu: 0.0.40
codegen_flags: <defaults>
</compile_context>

<pallas_src>
import jax
import jax.numpy as jnp
import numpy as np
from jax.experimental import pallas as pl
from jax.experimental.pallas import tpu as pltpu

ALPHA = 1.0  # SplitPoisson alpha; the PinvNet docstring example uses alpha = 1.0


# ---------------------------------------------------------------------------
# Kernel: out[i, j] = sum_k x[i, k] @ W[k, j] + b[j], tiled (batch, out-col, K).
# The output BlockSpec returns the same block for every k, so the f32 output
# tile is VMEM-resident across the reduction and doubles as the accumulator.
# ---------------------------------------------------------------------------
def _pinvnet_kernel(x_ref, w_ref, b_ref, out_ref):
    @pl.when(pl.program_id(2) == 0)
    def _():
        out_ref[...] = jnp.broadcast_to(b_ref[...], out_ref.shape)

    # bf16 x bf16 -> f32 accumulation: single native MXU pass, no in-kernel casts.
    out_ref[...] += jnp.dot(
        x_ref[...], w_ref[...], preferred_element_type=jnp.float32
    )


# ---------------------------------------------------------------------------
# Host-side operator fusion (HadamSplit + NoNoise + SplitPoisson + PseudoInverse)
# ---------------------------------------------------------------------------
def _round_up(x, m):
    return ((x + m - 1) // m) * m


def _pick_tile(n, candidates=(1024, 512, 256, 128), min_blocks=1):
    for c in candidates:
        if n % c == 0 and n // c >= min_blocks:
            return c
    return n


def make_pinvnet_params(h, alpha=ALPHA, weight_dtype=jnp.bfloat16):
    """Fused affine operator for PinvNet with M = N = h*h (power of two), Ord = ones."""
    N = h * h
    if N <= 0 or (N & (N - 1)) != 0:
        raise ValueError(f"N = h*h = {N} must be a power of two for the Hadamard build.")
    Hmat = np.array([[1.0]], dtype=np.float64)
    base = np.array([[1.0, 1.0], [1.0, -1.0]], dtype=np.float64)
    while Hmat.shape[0] < N:
        Hmat = np.kron(Hmat, base)
    # TODO(synk): spyrit uses the Walsh-ordered Hadamard + Ord-based row permutation
    # (and its reindex in meas2img); with Ord = ones and M = N the fused
    # acquisition∘prep∘pinv composition is identical (H^T H / N = I for any row
    # ordering), so the permutation folds away here.  For M < N or a general Ord
    # this fold is NOT equivalent and must not be used.
    F = Hmat  # (M, N) measurement matrix H, M == N

    # Row-vector layout of the spyrit chain:
    #   xn = (x + 1) / 2
    #   m  = (2/alpha) * (xn @ H^T) - (H @ 1)^T        (relu(H) - relu(-H) = H)
    #   x_hat = m @ (H^dagger)^T,  H^dagger = H^T / N
    # Fused:  x_hat = x @ W_eff + b_eff
    pinv_t = F / float(N)                                   # (M, N) = (H^dagger)^T
    w_fused = (2.0 / alpha) * (F.T @ pinv_t)                # (N, N)
    hones = (F @ np.ones((N,), np.float64)).reshape(1, -1)  # (1, M); here M == N
    b_fused = hones @ pinv_t                                # (1, N)
    w_eff = 0.5 * w_fused                                   # fold xn = 0.5*x + 0.5
    b_eff = 0.5 * np.ones((1, N)) @ w_fused - b_fused       # (1, N)

    # Pad feature axes to lane multiples of 128 (zero rows/cols are inert) so
    # stores are lane-dense and blocks satisfy the (8, 128) constraint.
    Np = _round_up(N, 128)
    w_pad = np.zeros((Np, Np), np.float64)
    w_pad[:N, :N] = w_eff
    b_pad = np.zeros((1, Np), np.float64)
    b_pad[:, :N] = b_eff

    # For the full-Hadamard, alpha=1 configuration W_eff is exactly the identity
    # and b_eff is exactly zero, so bf16 storage is lossless.  For an arbitrary
    # H / alpha pass weight_dtype=jnp.float32 (it only quantizes W otherwise).
    return jnp.asarray(w_pad, weight_dtype), jnp.asarray(b_pad, jnp.float32)


# ---------------------------------------------------------------------------
# Forward wrapper: (B, C, H, W) ground-truth images -> (B, C, H, W) reconstruction
# ---------------------------------------------------------------------------
def pinvnet_forward(x, w, b, x_dtype=jnp.bfloat16):
    """x_dtype=jnp.bfloat16 (default) feeds the MXU its native bf16 path; pass
    jnp.float32 together with float32 weights for a full-precision path."""
    B, C, H, W = x.shape
    N = H * W
    BC = B * C
    Np = w.shape[0]

    xf = x.reshape(BC, N).astype(x_dtype)
    if Np != N:
        xf = jnp.pad(xf, ((0, 0), (0, Np - N)))

    # Batch tile: 16-row multiples (bf16 sublane packing), up to 256 rows for
    # maximal reuse of each HBM-streamed W tile; pad rows with zeros (inert).
    tile_b = min(256, _round_up(BC, 16))
    BCp = _round_up(BC, tile_b)
    if BCp != BC:
        xf = jnp.pad(xf, ((0, BCp - BC), (0, 0)))

    tile_k = _pick_tile(Np)  # contraction tile
    # If the batch axis has only one block, keep >= 2 output-column blocks so the
    # second TensorCore on v7x still gets work (harmless on v5e/v6e).
    tile_n = _pick_tile(Np, min_blocks=1 if BCp // tile_b >= 2 else 2)

    grid = (BCp // tile_b, Np // tile_n, Np // tile_k)
    # Worst-case double-buffered working set (tile_b=256, tile_k=tile_n=1024,
    # bf16 x/W, f32 resident out) ~ 7 MiB: fits default scoped VMEM everywhere.

    out = pl.pallas_call(
        _pinvnet_kernel,
        out_shape=jax.ShapeDtypeStruct((BCp, Np), jnp.float32),
        grid_spec=pltpu.PrefetchScalarGridSpec(
            num_scalar_prefetch=0,
            grid=grid,
            in_specs=[
                pl.BlockSpec((tile_b, tile_k), lambda i, j, k: (i, k)),  # x  (bf16)
                pl.BlockSpec((tile_k, tile_n), lambda i, j, k: (k, j)),  # W  (bf16)
                pl.BlockSpec((1, tile_n), lambda i, j, k: (0, j)),       # bias (f32)
            ],
            out_specs=pl.BlockSpec((tile_b, tile_n), lambda i, j, k: (i, j)),
        ),
        compiler_params=pltpu.CompilerParams(
            dimension_semantics=("parallel", "parallel", "arbitrary")),
    )(xf, w, b)

    return out[:BC, :N].reshape(B, C, H, W)


# ---------------------------------------------------------------------------
# Pure-JAX unfused reference (semantics check of the original module chain)
# ---------------------------------------------------------------------------
def pinvnet_reference(x, h, alpha=ALPHA):
    N = h * h
    Hmat = np.array([[1.0]], dtype=np.float64)
    base = np.array([[1.0, 1.0], [1.0, -1.0]], dtype=np.float64)
    while Hmat.shape[0] < N:
        Hmat = np.kron(Hmat, base)
    F = jnp.asarray(Hmat, jnp.float32)
    B, C, H, W = x.shape
    xn = ((x + 1.0) * 0.5).reshape(B * C, N).astype(jnp.float32)
    y_pos = xn @ jnp.maximum(F, 0.0).T
    y_neg = xn @ jnp.maximum(-F, 0.0).T
    m = (2.0 / alpha) * (y_pos - y_neg) - (F @ jnp.ones((N,), jnp.float32))[None, :]
    xh = m @ (F / float(N))
    return xh.reshape(B, C, H, W)


if __name__ == "__main__":
    B, C, h = 2, 4, 16  # N = M = 256
    key = jax.random.PRNGKey(0)
    x = jax.random.uniform(key, (B, C, h, h), dtype=jnp.float32, minval=-1.0, maxval=1.0)

    # Fast path: bf16 weights + bf16 inputs on the MXU, f32 accumulation.
    w, b = make_pinvnet_params(h)
    z = jax.block_until_ready(pinvnet_forward(x, w, b))
    assert z.shape == x.shape, (z.shape, x.shape)

    ref = pinvnet_reference(x, h)
    err_vs_ref = float(jnp.linalg.norm(z - ref) / jnp.linalg.norm(ref))
    assert err_vs_ref < 5e-3, err_vs_ref          # bf16-input quantization level
    rel_err = float(jnp.linalg.norm(x - z) / jnp.linalg.norm(x))
    assert rel_err < 5e-3, rel_err                # full Hadamard => x_hat ≈ x

    # Full-precision path: reproduces the PinvNet docstring's near-perfect recon.
    w32, b32 = make_pinvnet_params(h, weight_dtype=jnp.float32)
    z32 = jax.block_until_ready(pinvnet_forward(x, w32, b32, x_dtype=jnp.float32))
    rel_err32 = float(jnp.linalg.norm(x - z32) / jnp.linalg.norm(x))
    assert rel_err32 < 1e-4, rel_err32

    print("KERNEL_OK")
</pallas_src>

<mosaic_0001>
module attributes {stable_mosaic.version = 11 : i64} {
  func.func @_pinvnet_kernel(%arg0: i32, %arg1: i32, %arg2: i32, %arg3: memref<16x256xbf16, #tpu.memory_space<vmem>>, %arg4: memref<256x128xbf16, #tpu.memory_space<vmem>>, %arg5: memref<1x128xf32, #tpu.memory_space<vmem>>, %arg6: memref<16x128xf32, #tpu.memory_space<vmem>>) attributes {dimension_semantics = [#tpu.dimension_semantics<parallel>, #tpu.dimension_semantics<parallel>, #tpu.dimension_semantics<arbitrary>], iteration_bounds = array<i64: 1, 2, 1>, scalar_prefetch = 0 : i64, scratch_operands = 0 : i64, tpu.core_type = #tpu.core_type<tc>, window_params = [{transform_indices = @transform_0, window_bounds = array<i64: 16, 256>}, {transform_indices = @transform_1, window_bounds = array<i64: 256, 128>}, {transform_indices = @transform_2, window_bounds = array<i64: 1, 128>}, {transform_indices = @transform_3, window_bounds = array<i64: 16, 128>}]} {
    %c0_i32 = arith.constant 0 : i32
    %0 = arith.cmpi eq, %arg2, %c0_i32 : i32
    %1 = arith.extui %0 : i1 to i32
    %c0_i32_0 = arith.constant 0 : i32
    %2 = arith.cmpi ne, %1, %c0_i32_0 : i32
    scf.if %2 {
      %c0_8 = arith.constant 0 : index
      %c0_9 = arith.constant 0 : index
      %9 = vector.load %arg5[%c0_8, %c0_9] : memref<1x128xf32, #tpu.memory_space<vmem>>, vector<1x128xf32>
      %10 = vector.shape_cast %9 : vector<1x128xf32> to vector<1x128xf32>
      %11 = vector.broadcast %10 : vector<1x128xf32> to vector<16x128xf32>
      %c0_10 = arith.constant 0 : index
      %c0_11 = arith.constant 0 : index
      %12 = vector.load %arg6[%c0_10, %c0_11] : memref<16x128xf32, #tpu.memory_space<vmem>>, vector<16x128xf32>
      tpu.vector_store %arg6[%c0_10, %c0_11], %11 {strides = array<i32>} : memref<16x128xf32, #tpu.memory_space<vmem>>, vector<16x128xf32>,
    } else {
    }
    %c0 = arith.constant 0 : index
    %c0_1 = arith.constant 0 : index
    %3 = vector.load %arg6[%c0, %c0_1] : memref<16x128xf32, #tpu.memory_space<vmem>>, vector<16x128xf32>
    %c0_2 = arith.constant 0 : index
    %c0_3 = arith.constant 0 : index
    %4 = vector.load %arg3[%c0_2, %c0_3] : memref<16x256xbf16, #tpu.memory_space<vmem>>, vector<16x256xbf16>
    %c0_4 = arith.constant 0 : index
    %c0_5 = arith.constant 0 : index
    %5 = vector.load %arg4[%c0_4, %c0_5] : memref<256x128xbf16, #tpu.memory_space<vmem>>, vector<256x128xbf16>
    %cst = arith.constant dense<0.000000e+00> : vector<16x128xf32>
    %6 = tpu.matmul %4, %5, %cst {dimension_numbers = #tpu.dot_dimension_numbers<[1], [0], [0], [1], [0, 0, 1, 1], [], []>} : vector<16x256xbf16>, vector<256x128xbf16>, vector<16x128xf32> -> vector<16x128xf32>
    %7 = arith.addf %3, %6 : vector<16x128xf32>
    %c0_6 = arith.constant 0 : index
    %c0_7 = arith.constant 0 : index
    %8 = vector.load %arg6[%c0_6, %c0_7] : memref<16x128xf32, #tpu.memory_space<vmem>>, vector<16x128xf32>
    tpu.vector_store %arg6[%c0_6, %c0_7], %7 {strides = array<i32>} : memref<16x128xf32, #tpu.memory_space<vmem>>, vector<16x128xf32>,
    return
  }
  func.func @transform_0(%arg0: i32, %arg1: i32, %arg2: i32) -> (i32, i32) {
    %c0_i32 = arith.constant 0 : i32
    return %arg0, %arg2 : i32, i32
  }
  func.func @transform_1(%arg0: i32, %arg1: i32, %arg2: i32) -> (i32, i32) {
    %c0_i32 = arith.constant 0 : i32
    return %arg2, %arg1 : i32, i32
  }
  func.func @transform_2(%arg0: i32, %arg1: i32, %arg2: i32) -> (i32, i32) {
    %c0_i32 = arith.constant 0 : i32
    %c0_i32_0 = arith.constant 0 : i32
    return %c0_i32, %arg1 : i32, i32
  }
  func.func @transform_3(%arg0: i32, %arg1: i32, %arg2: i32) -> (i32, i32) {
    %c0_i32 = arith.constant 0 : i32
    return %arg0, %arg1 : i32, i32
  }
}

</mosaic_0001>

<llo_original>
// kernel: tpu_custom_call.1
$region0: #{tpu_custom_call.1}
  #allocation0 [shape = 'u32[]', space=smem, size = 0x4, offset = 0x4, fixed_abs, tag = 'smem constant byte address 0x4 - core index']
  #allocation1 [shape = 'u32[144,128]{1,0:T(1,128)}', space=vmem, size = 0x12000, scoped, tag = 'internal scratch']
  %s0 = inlined_call_operand.hbm [shape: bf16[16,256], index: 0, kind: input, shape index: {}]
  %s1 = inlined_call_operand.hbm [shape: bf16[256,256], index: 1, kind: input, shape index: {}]
  %s2 = inlined_call_operand.vmem [shape: f32[1,256], index: 2, kind: input, shape index: {}]
  %s3 = inlined_call_operand.hbm [shape: f32[16,256], index: 3, kind: output, shape index: {}]
  %s4 = sld [smem:[#allocation0]]
  $region57: #{tpu_custom_call.1} parent=0
    _
  %s6 = ssub.s32 1, %s4
  %s7 = scalar_select 0, %s6, %s4
  $region1: #{tpu_custom_call.1} parent=0
    #allocation2 [shape = 'u8[8192]{0}', space=vmem, size = 0x2000, scoped, tag = 'input window, operand 0, single buffered']
    #allocation3 [shape = 's32[2]{0}', space=sflag, size = 0x8, scoped, tag = 'scoped memory for tpu_custom_call.1']
    #allocation4 [shape = 's32[2]{0}', space=sflag, size = 0x8, scoped, tag = 'scoped memory for tpu_custom_call.1']
    #allocation5 [shape = 'u8[131072]{0}', space=vmem, size = 0x20000, scoped, tag = 'input window, operand 1']
    #allocation6 [shape = 's32[2]{0}', space=sflag, size = 0x8, scoped, tag = 'scoped memory for tpu_custom_call.1']
    #allocation7 [shape = 'u8[16384]{0}', space=vmem, size = 0x4000, scoped, tag = 'output window, operand 0']
    %8 = vsyncpa [#allocation3], 0
    %9 = vsyncpa [#allocation6], 0
    %s10 = scalar_lea.sflag [#allocation6], 1
    %11 = vsyncpa %s10, 0
    %12 = vsyncpa [#allocation4], 0
    %s13 = scalar_lea.sflag [#allocation4], 1
    %14 = vsyncpa %s13, 0
    loop: start=0, step=1, limit=4
    $region2: #{tpu_custom_call.1} parent=1 // loop_pre_header
      _
    $region3: #{tpu_custom_call.1} parent=1 // loop_header
      %s16 = sphi 0, %s20
      %p17 = scmp.ge.s32.totalorder %s16, 4
      %s23 = sphi 0, %s42
      %s24 = sphi 0, %s38
      %s25 = sphi 0, %s34
      %s26 = sphi 0, %s23
      %s27 = sphi 0, %s24
      %s28 = sphi 0, %s25
      %s29 = sphi 0, %s26
      %s30 = sphi 0, %s27
      %s31 = sphi 0, %s28
      %s47 = sphi 0, %s49
      %s50 = sphi 0, %s47
      %s51 = sphi 0, %s50
      %s67 = sphi 0, %s51
      %s75 = sphi 0, %s77
      %s78 = sphi 0, %s75
      %s79 = sphi 0, %s78
      %s95 = sphi 0, %s79
      %s101 = sphi 0, %s103
      %s104 = sphi 0, %s101
      %s105 = sphi 0, %s104
      %s121 = sphi 0, %s105
      %s129 = sphi 0, %s131
      %s132 = sphi 0, %s129
      %s133 = sphi 0, %s132
      %s149 = sphi 0, %s133
    $region4: #{tpu_custom_call.1} parent=1 // loop_header_branch
      %19 = sbr.rel (%p17) target = $region8
    $region5: #{tpu_custom_call.1} parent=1 // loop_body
      %s21 = ssub.s32 %s16, 1
      %s22 = ssub.s32 %s16, 2
      %s32 = sadd.s32 1, %s25
      %p33 = scmp.ge.s32.totalorder %s32, 1
      %s34 = scalar_select %p33, 0, %s32
      %s35 = sadd.s32 1, %s24
      %s36 = scalar_select %p33, %s35, %s24
      %p37 = scmp.ge.s32.totalorder %s36, 2
      %s38 = scalar_select %p37, 0, %s36
      %s39 = sadd.s32 1, %s23
      %s40 = scalar_select %p37, %s39, %s23
      %p41 = scmp.ge.s32.totalorder %s40, 1
      %s42 = scalar_select %p41, 0, %s40
      %s43 = ssub.s32 %s23, %s42
      %s44 = ssub.s32 %s25, %s34
      %s45 = sor.u32 %s43, %s44
      %p46 = scmp.eq.s32.totalorder %s45, 0
      %s48 = sadd.s32 %s47, 1
      %s49 = scalar_select %p46, %s47, %s48
      %p52 = pneg %p46
      %p53 = scmp.eq.s32.totalorder %s16, 1
      %p54 = por %p52, %p53
      %p55 = scmp.ne.s32.totalorder %s47, %s50
      %p56 = scmp.eq.s32.totalorder %s16, 0
      %p57 = por %p55, %p56
      %p58 = scmp.ne.s32.totalorder %s47, %s50
      %p59 = scmp.eq.s32.totalorder %s21, 1
      %p60 = por %p58, %p59
      %p61 = scmp.ne.s32.totalorder %s50, %s51
      %p62 = scmp.eq.s32.totalorder %s21, 0
      %p63 = por %p61, %p62
      %p64 = scmp.ne.s32.totalorder %s50, %s51
      %p65 = scmp.eq.s32.totalorder %s22, 1
      %p66 = por %p64, %p65
      %p68 = scmp.ne.s32.totalorder %s51, %s67
      %p69 = scmp.eq.s32.totalorder %s22, 0
      %p70 = por %p68, %p69
      %s71 = ssub.s32 %s25, %s34
      %s72 = ssub.s32 %s24, %s38
      %s73 = sor.u32 %s71, %s72
      %p74 = scmp.eq.s32.totalorder %s73, 0
      %s76 = sadd.s32 %s75, 1
      %s77 = scalar_select %p74, %s75, %s76
      %p80 = pneg %p74
      %p81 = scmp.eq.s32.totalorder %s16, 1
      %p82 = por %p80, %p81
      %p83 = scmp.ne.s32.totalorder %s75, %s78
      %p84 = scmp.eq.s32.totalorder %s16, 0
      %p85 = por %p83, %p84
      %p86 = scmp.ne.s32.totalorder %s75, %s78
      %p87 = scmp.eq.s32.totalorder %s21, 1
      %p88 = por %p86, %p87
      %p89 = scmp.ne.s32.totalorder %s78, %s79
      %p90 = scmp.eq.s32.totalorder %s21, 0
      %p91 = por %p89, %p90
      %p92 = scmp.ne.s32.totalorder %s78, %s79
      %p93 = scmp.eq.s32.totalorder %s22, 1
      %p94 = por %p92, %p93
      %p96 = scmp.ne.s32.totalorder %s79, %s95
      %p97 = scmp.eq.s32.totalorder %s22, 0
      %p98 = por %p96, %p97
      %s99 = ssub.s32 %s24, %s38
      %p100 = scmp.eq.s32.totalorder %s99, 0
      %s102 = sadd.s32 %s101, 1
      %s103 = scalar_select %p100, %s101, %s102
      %p106 = pneg %p100
      %p107 = scmp.eq.s32.totalorder %s16, 1
      %p108 = por %p106, %p107
      %p109 = scmp.ne.s32.totalorder %s101, %s104
      %p110 = scmp.eq.s32.totalorder %s16, 0
      %p111 = por %p109, %p110
      %p112 = scmp.ne.s32.totalorder %s101, %s104
      %p113 = scmp.eq.s32.totalorder %s21, 1
      %p114 = por %p112, %p113
      %p115 = scmp.ne.s32.totalorder %s104, %s105
      %p116 = scmp.eq.s32.totalorder %s21, 0
      %p117 = por %p115, %p116
      %p118 = scmp.ne.s32.totalorder %s104, %s105
      %p119 = scmp.eq.s32.totalorder %s22, 1
      %p120 = por %p118, %p119
      %p122 = scmp.ne.s32.totalorder %s105, %s121
      %p123 = scmp.eq.s32.totalorder %s22, 0
      %p124 = por %p122, %p123
      %s125 = ssub.s32 %s23, %s42
      %s126 = ssub.s32 %s24, %s38
      %s127 = sor.u32 %s125, %s126
      %p128 = scmp.eq.s32.totalorder %s127, 0
      %s130 = sadd.s32 %s129, 1
      %s131 = scalar_select %p128, %s129, %s130
      %p134 = pneg %p128
      %p135 = scmp.eq.s32.totalorder %s16, 1
      %p136 = por %p134, %p135
      %p137 = scmp.ne.s32.totalorder %s129, %s132
      %p138 = scmp.eq.s32.totalorder %s16, 0
      %p139 = por %p137, %p138
      %p140 = scmp.ne.s32.totalorder %s129, %s132
      %p141 = scmp.eq.s32.totalorder %s21, 1
      %p142 = por %p140, %p141
      %p143 = scmp.ne.s32.totalorder %s132, %s133
      %p144 = scmp.eq.s32.totalorder %s21, 0
      %p145 = por %p143, %p144
      %p146 = scmp.ne.s32.totalorder %s132, %s133
      %p147 = scmp.eq.s32.totalorder %s22, 1
      %p148 = por %p146, %p147
      %p150 = scmp.ne.s32.totalorder %s133, %s149
      %p151 = scmp.eq.s32.totalorder %s22, 0
      %p152 = por %p150, %p151
      %p153 = scmp.le.s32.totalorder 1, %s16
      %p154 = scmp.lt.s32.totalorder %s16, 3
      %p155 = pnand %p153, %p154
      %p156 = pneg %p155
      // Predicated region
      $region9: #{tpu_custom_call.1} parent=5 // pred_check
        _
      $region10: #{tpu_custom_call.1} parent=5 // pred_check_branch
        %158 = sbr.rel (%p155) target = $region12
      $region11: #{tpu_custom_call.1} parent=5 // pred_region
        %s159 = ssub.s32 %s16, 1
        // Predicated region
        $region13: #{tpu_custom_call.1} parent=11 // pred_check
          %p160 = pneg %p63
        $region14: #{tpu_custom_call.1} parent=11 // pred_check_branch
          %162 = sbr.rel (%p160) target = $region16
        $region15: #{tpu_custom_call.1} parent=11 // pred_region
          %s163 = smul.u32 2, %s26
          %s164 = smul.u32 2, %s28
          %s166 = ssub.s32 256, 256
          %167 = vsyncadd [#allocation3], %s166
          %s168 = smul.addr %s163, 2
          %s169 = sadd.s32 %s164, %s168
          %s170 = smul.addr %s169, 64
          %s171 = scalar_lea.hbm %s0, %s170
          %s172 = sshll.u32 [#allocation2], 4
          %s173 = int_to_ptr.vmem [resolvable:$true] %s172
          %178 = dma.hbm_to_vmem [thread:$0]  %s171, 256, %s173, [#allocation3], 128, 128, 8
        $region16: #{tpu_custom_call.1} parent=11 // pred_fallthru
          _
      $region12: #{tpu_custom_call.1} parent=5 // pred_fallthru
        _
      %p179 = scmp.lt.s32.totalorder %s16, 2
      // Predicated region
      $region17: #{tpu_custom_call.1} parent=5 // pred_check
        %p180 = pneg %p179
      $region18: #{tpu_custom_call.1} parent=5 // pred_check_branch
        %182 = sbr.rel (%p180) target = $region20
      $region19: #{tpu_custom_call.1} parent=5 // pred_region
        // Predicated region
        $region21: #{tpu_custom_call.1} parent=19 // pred_check
          %p183 = pneg %p85
        $region22: #{tpu_custom_call.1} parent=19 // pred_check_branch
          %185 = sbr.rel (%p183) target = $region24
        $region23: #{tpu_custom_call.1} parent=19 // pred_region
          %s186 = sand.u32 %s75, 1
          %s187 = scalar_lea.sflag [#allocation6], %s186
          %s188 = sand.u32 %s75, 1
          %s189 = smul.addr %s188, 128
          %s190 = scalar_lea.vmem [#allocation5], %s189
          %s191 = smul.u32 32, %s25
          %s193 = ssub.s32 2048, 2048
          %194 = vsyncadd %s187, %s193
          %s195 = smul.addr %s191, 2
          %s196 = sadd.s32 %s24, %s195
          %s197 = smul.addr %s196, 64
          %s198 = scalar_lea.hbm %s1, %s197
          %s199 = sshll.u32 %s190, 4
          %s200 = int_to_ptr.vmem [resolvable:$true] %s199
          %205 = dma.hbm_to_vmem [thread:$0]  %s198, 2048, %s200, %s187, 128, 64, 4
        $region24: #{tpu_custom_call.1} parent=19 // pred_fallthru
          _
        // Predicated region
        $region25: #{tpu_custom_call.1} parent=19 // pred_check
          %p206 = pneg %p111
        $region26: #{tpu_custom_call.1} parent=19 // pred_check_branch
          %208 = sbr.rel (%p206) target = $region28
        $region27: #{tpu_custom_call.1} parent=19 // pred_region
          %p209 = scmp.lt.s32.totalorder %s24, 1
          %s210 = scalar_select %p209, %s24, 1
          %s211 = scalar_lea.vmem %s2, %s210
        $region28: #{tpu_custom_call.1} parent=19 // pred_fallthru
          _
      $region20: #{tpu_custom_call.1} parent=5 // pred_fallthru
        _
      %p212 = scmp.le.s32.totalorder 1, %s16
      %p213 = scmp.lt.s32.totalorder %s16, 3
      %p214 = pnand %p212, %p213
      %p215 = pneg %p214
      // Predicated region
      $region29: #{tpu_custom_call.1} parent=5 // pred_check
        _
      $region30: #{tpu_custom_call.1} parent=5 // pred_check_branch
        %217 = sbr.rel (%p214) target = $region32
      $region31: #{tpu_custom_call.1} parent=5 // pred_region
        %s218 = ssub.s32 %s16, 1
        // Predicated region
        $region33: #{tpu_custom_call.1} parent=31 // pred_check
          %p219 = pneg %p63
        $region34: #{tpu_custom_call.1} parent=31 // pred_check_branch
          %221 = sbr.rel (%p219) target = $region36
        $region35: #{tpu_custom_call.1} parent=31 // pred_region
          %222 = dma.done [#allocation3], 256
        $region36: #{tpu_custom_call.1} parent=31 // pred_fallthru
          _
        %s223 = sand.u32 %s78, 1
        %s224 = scalar_lea.sflag [#allocation6], %s223
        %s225 = sand.u32 %s78, 1
        %s226 = smul.addr %s225, 128
        %s227 = scalar_lea.vmem [#allocation5], %s226
        // Predicated region
        $region37: #{tpu_custom_call.1} parent=31 // pred_check
          %p228 = pneg %p91
        $region38: #{tpu_custom_call.1} parent=31 // pred_check_branch
          %230 = sbr.rel (%p228) target = $region40
        $region39: #{tpu_custom_call.1} parent=31 // pred_region
          %231 = dma.done %s224, 2048
        $region40: #{tpu_custom_call.1} parent=31 // pred_fallthru
          _
        %p232 = pneg %p63
        %p233 = pneg %p60
        %s234 = sand.u32 %s78, 1
        %s235 = scalar_lea.sflag [#allocation6], %s234
        %s236 = sand.u32 %s78, 1
        %s237 = smul.addr %s236, 128
        %s238 = scalar_lea.vmem [#allocation5], %s237
        %p239 = pneg %p91
        %p240 = pneg %p88
        %p241 = scmp.lt.s32.totalorder %s27, 1
        %s242 = scalar_select %p241, %s27, 1
        %s243 = scalar_lea.vmem %s2, %s242
        %p244 = pneg %p117
        %p245 = pneg %p114
        %p246 = pneg %p145
        %p247 = pneg %p142
        %s248 = sand.u32 %s132, 1
        %s249 = scalar_lea.sflag [#allocation4], %s248
        %s250 = sand.u32 %s132, 1
        %s251 = smul.addr %s250, 16
        %s252 = scalar_lea.vmem [#allocation7], %s251
        %s253 = smul.u32 2, %s26
        %s254 = smul.u32 2, %s28
        %s255 = smul.u32 32, %s28
        %p256 = scmp.lt.s32.totalorder %s27, 1
        %s257 = scalar_select %p256, %s27, 1
        %s258 = scalar_lea.vmem %s2, %s257
        %s259 = smul.u32 2, %s26
        %p261 = scmp.eq.s32.totalorder %s28, 0
        // Predicated region
        $region41: #{tpu_custom_call.1} parent=31 // pred_check
          %p262 = pneg %p261
        $region42: #{tpu_custom_call.1} parent=31 // pred_check_branch
          %264 = sbr.rel (%p262) target = $region44
        $region43: #{tpu_custom_call.1} parent=31 // pred_region
          %v265 = vld [vmem:[%s258] sm:$0x1]
          %v267 = vlaneseq
          %v268 = vshrl.u32 %v267, 7
          %v269 = vsub.s32 0, %v268
          %v270 = vrot.slane %v265, %v269
          %272 = vst [vmem:[%s252] sm:$0xff] %v270
          %273 = vst [vmem:[%s252 + $0x8] sm:$0xff] %v270
        $region44: #{tpu_custom_call.1} parent=31 // pred_fallthru
          _
        %v274 = vld [vmem:[%s252] sm:$0xff]
        %v275 = vld [vmem:[%s252 + $0x8] sm:$0xff]
        %v276 = vld [vmem:[#allocation2] sm:$0xff]
        %v277 = vld [vmem:[#allocation2 + $0x8] sm:$0xff]
        %v278 = vld [vmem:[%s227] sm:$0xf]
        %v279 = vld [vmem:[%s227 + $0x4] sm:$0xf]
        %v280 = vld [vmem:[%s227 + $0x8] sm:$0xf]
        %v281 = vld [vmem:[%s227 + $0xc] sm:$0xf]
        %v282 = vld [vmem:[%s227 + $0x10] sm:$0xf]
        %v283 = vld [vmem:[%s227 + $0x14] sm:$0xf]
        %v284 = vld [vmem:[%s227 + $0x18] sm:$0xf]
        %v285 = vld [vmem:[%s227 + $0x1c] sm:$0xf]
        %v286 = vld [vmem:[%s227 + $0x20] sm:$0xf]
        %v287 = vld [vmem:[%s227 + $0x24] sm:$0xf]
        %v288 = vld [vmem:[%s227 + $0x28] sm:$0xf]
        %v289 = vld [vmem:[%s227 + $0x2c] sm:$0xf]
        %v290 = vld [vmem:[%s227 + $0x30] sm:$0xf]
        %v291 = vld [vmem:[%s227 + $0x34] sm:$0xf]
        %v292 = vld [vmem:[%s227 + $0x38] sm:$0xf]
        %v293 = vld [vmem:[%s227 + $0x3c] sm:$0xf]
        %v294 = vld [vmem:[%s227 + $0x40] sm:$0xf]
        %v295 = vld [vmem:[%s227 + $0x44] sm:$0xf]
        %v296 = vld [vmem:[%s227 + $0x48] sm:$0xf]
        %v297 = vld [vmem:[%s227 + $0x4c] sm:$0xf]
        %v298 = vld [vmem:[%s227 + $0x50] sm:$0xf]
        %v299 = vld [vmem:[%s227 + $0x54] sm:$0xf]
        %v300 = vld [vmem:[%s227 + $0x58] sm:$0xf]
        %v301 = vld [vmem:[%s227 + $0x5c] sm:$0xf]
        %v302 = vld [vmem:[%s227 + $0x60] sm:$0xf]
        %v303 = vld [vmem:[%s227 + $0x64] sm:$0xf]
        %v304 = vld [vmem:[%s227 + $0x68] sm:$0xf]
        %v305 = vld [vmem:[%s227 + $0x6c] sm:$0xf]
        %v306 = vld [vmem:[%s227 + $0x70] sm:$0xf]
        %v307 = vld [vmem:[%s227 + $0x74] sm:$0xf]
        %v308 = vld [vmem:[%s227 + $0x78] sm:$0xf]
        %v309 = vld [vmem:[%s227 + $0x7c] sm:$0xf]
        %v312 = vunpack.c.l.b16 %v276
        %v313 = vunpack.c.h.b16 %v276
        %v314 = vunpack.c.l.b16 %v277
        %v315 = vunpack.c.h.b16 %v277
        %v316 = vpack.c.b16 %v314, %v312
        %v317 = vpack.c.b16 %v315, %v313
        %v352 = vunpack.c.l.b16 %v278
        %v353 = vunpack.c.l.b16 %v279
        %v354 = vunpack.c.l.b16 %v280
        %v355 = vunpack.c.l.b16 %v281
        %v356 = vunpack.c.l.b16 %v282
        %v357 = vunpack.c.l.b16 %v283
        %v358 = vunpack.c.l.b16 %v284
        %v359 = vunpack.c.l.b16 %v285
        %v360 = vunpack.c.l.b16 %v286
        %v361 = vunpack.c.l.b16 %v287
        %v362 = vunpack.c.l.b16 %v288
        %v363 = vunpack.c.l.b16 %v289
        %v364 = vunpack.c.l.b16 %v290
        %v365 = vunpack.c.l.b16 %v291
        %v366 = vunpack.c.l.b16 %v292
        %v367 = vunpack.c.l.b16 %v293
        %v368 = vunpack.c.l.b16 %v294
        %v369 = vunpack.c.l.b16 %v295
        %v370 = vunpack.c.l.b16 %v296
        %v371 = vunpack.c.l.b16 %v297
        %v372 = vunpack.c.l.b16 %v298
        %v373 = vunpack.c.l.b16 %v299
        %v374 = vunpack.c.l.b16 %v300
        %v375 = vunpack.c.l.b16 %v301
        %v376 = vunpack.c.l.b16 %v302
        %v377 = vunpack.c.l.b16 %v303
        %v378 = vunpack.c.l.b16 %v304
        %v379 = vunpack.c.l.b16 %v305
        %v380 = vunpack.c.l.b16 %v306
        %v381 = vunpack.c.l.b16 %v307
        %v382 = vunpack.c.l.b16 %v308
        %v383 = vunpack.c.l.b16 %v309
        %v384 = vpack.c.b16 %v353, %v352
        %v385 = vpack.c.b16 %v355, %v354
        %v386 = vpack.c.b16 %v357, %v356
        %v387 = vpack.c.b16 %v359, %v358
        %v388 = vpack.c.b16 %v361, %v360
        %v389 = vpack.c.b16 %v363, %v362
        %v390 = vpack.c.b16 %v365, %v364
        %v391 = vpack.c.b16 %v367, %v366
        %v392 = vpack.c.b16 %v369, %v368
        %v393 = vpack.c.b16 %v371, %v370
        %v394 = vpack.c.b16 %v373, %v372
        %v395 = vpack.c.b16 %v375, %v374
        %v396 = vpack.c.b16 %v377, %v376
        %v397 = vpack.c.b16 %v379, %v378
        %v398 = vpack.c.b16 %v381, %v380
        %v399 = vpack.c.b16 %v383, %v382
        %416 = vmatprep.subr.bf16.mxu0 0
        %417 = vmatpush1.bf16.msra.mxu0 %v391
        %418 = vmatprep.subr.bf16.mxu0 0
        %419 = vmatpush1.bf16.msra.mxu0 %v390
        %420 = vmatprep.subr.bf16.mxu0 0
        %421 = vmatpush1.bf16.msra.mxu0 %v389
        %422 = vmatprep.subr.bf16.mxu0 0
        %423 = vmatpush1.bf16.msra.mxu0 %v388
        %424 = vmatprep.subr.bf16.mxu0 0
        %425 = vmatpush1.bf16.msra.mxu0 %v387
        %426 = vmatprep.subr.bf16.mxu0 0
        %427 = vmatpush1.bf16.msra.mxu0 %v386
        %428 = vmatprep.subr.bf16.mxu0 0
        %429 = vmatpush1.bf16.msra.mxu0 %v385
        %430 = vmatprep.subr.bf16.mxu0 0
        %431 = vmatpush1.bf16.msra.mxu0 %v384
        %432 = vmatprep.subr.bf16.mxu0 0
        %433 = vmatpush2.bf16.msra.mxu0 %v399
        %434 = vmatprep.subr.bf16.mxu0 0
        %435 = vmatpush2.bf16.msra.mxu0 %v398
        %436 = vmatprep.subr.bf16.mxu0 0
        %437 = vmatpush2.bf16.msra.mxu0 %v397
        %438 = vmatprep.subr.bf16.mxu0 0
        %439 = vmatpush2.bf16.msra.mxu0 %v396
        %440 = vmatprep.subr.bf16.mxu0 0
        %441 = vmatpush2.bf16.msra.mxu0 %v395
        %442 = vmatprep.subr.bf16.mxu0 0
        %443 = vmatpush2.bf16.msra.mxu0 %v394
        %444 = vmatprep.subr.bf16.mxu0 0
        %445 = vmatpush2.bf16.msra.mxu0 %v393
        %446 = vmatprep.subr.bf16.mxu0 0
        %447 = vmatpush2.bf16.msra.mxu0 %v392
        %448 = vmatprep.mubr.bf16.mxu0 %v317
        %449 = vmatmul.mubr.bf16.gmra.mxu0 %v316
        %v450 = vpop.f32.mrf.mxu0
        %v451 = vadd.f32 0.0, %v450
        %v452 = vpop.f32.mrf.mxu0
        %v453 = vpop.f32.mrf.mxu0
        %v454 = vadd.f32 0.0, %v453
        %v455 = vpop.f32.mrf.mxu0
        %456 = vdwg.mxu0
        %v457 = vadd.f32 %v274, %v451
        %v458 = vadd.f32 %v275, %v454
        %459 = vst [vmem:[%s252] sm:$0xff] %v457
        %460 = vst [vmem:[%s252 + $0x8] sm:$0xff] %v458
        %s461 = sand.u32 %s132, 1
        %s462 = scalar_lea.sflag [#allocation4], %s461
        %s463 = sand.u32 %s132, 1
        %s464 = smul.addr %s463, 16
        %s465 = scalar_lea.vmem [#allocation7], %s464
        // Predicated region
        $region45: #{tpu_custom_call.1} parent=31 // pred_check
          %p466 = pneg %p142
        $region46: #{tpu_custom_call.1} parent=31 // pred_check_branch
          %468 = sbr.rel (%p466) target = $region48
        $region47: #{tpu_custom_call.1} parent=31 // pred_region
          %s469 = smul.u32 2, %s26
          %s471 = ssub.s32 256, 256
          %472 = vsyncadd %s462, %s471
          %s473 = smul.addr %s469, 2
          %s474 = sadd.s32 %s27, %s473
          %s475 = smul.addr %s474, 128
          %s476 = scalar_lea.hbm %s3, %s475
          %s477 = sshll.u32 %s465, 4
          %s478 = int_to_ptr.vmem [resolvable:$true] %s477
          %483 = dma.vmem_to_hbm [thread:$0]  %s478, 256, %s476, %s462, 128, 256, 8
        $region48: #{tpu_custom_call.1} parent=31 // pred_fallthru
          _
      $region32: #{tpu_custom_call.1} parent=5 // pred_fallthru
        _
      %p484 = scmp.le.s32.totalorder 2, %s16
      // Predicated region
      $region49: #{tpu_custom_call.1} parent=5 // pred_check
        %p485 = pneg %p484
      $region50: #{tpu_custom_call.1} parent=5 // pred_check_branch
        %487 = sbr.rel (%p485) target = $region52
      $region51: #{tpu_custom_call.1} parent=5 // pred_region
        %s488 = ssub.s32 %s16, 2
        // Predicated region
        $region53: #{tpu_custom_call.1} parent=51 // pred_check
          %p489 = pneg %p148
        $region54: #{tpu_custom_call.1} parent=51 // pred_check_branch
          %491 = sbr.rel (%p489) target = $region56
        $region55: #{tpu_custom_call.1} parent=51 // pred_region
          %s492 = sand.u32 %s133, 1
          %s493 = scalar_lea.sflag [#allocation4], %s492
          %s494 = sand.u32 %s133, 1
          %s495 = smul.addr %s494, 16
          %s496 = scalar_lea.vmem [#allocation7], %s495
          %497 = dma.done %s493, 256
        $region56: #{tpu_custom_call.1} parent=51 // pred_fallthru
          _
      $region52: #{tpu_custom_call.1} parent=5 // pred_fallthru
        _
    $region6: #{tpu_custom_call.1} parent=1 // loop_footer
      %s20 = sadd.s32 1, %s16
    $region7: #{tpu_custom_call.1} parent=1 // loop_footer_branch
      %15 = sbr.rel target = $region3
    $region8: #{tpu_custom_call.1} parent=1 // loop_exit
      _
    %498 = vsyncpa [#allocation3], 1
    %s499 = scalar_lea.sflag [#allocation3], 1
    %500 = vsyncpa %s499, 1
    %501 = vsyncpa [#allocation6], 1
    %s502 = scalar_lea.sflag [#allocation6], 1
    %503 = vsyncpa %s502, 1
    %504 = vsyncpa [#allocation4], 1
    %s505 = scalar_lea.sflag [#allocation4], 1
    %506 = vsyncpa %s505, 1

</llo_original>
